<compile_context>
chip_gen: v7x
topology: tpu7x:2x2x1
jax: 0.10.0
libtpu: 0.0.40
codegen_flags: <defaults>
</compile_context>

<pallas_src>
import functools

import jax
import jax.numpy as jnp
from jax.experimental import pallas as pl
from jax.experimental.pallas import tpu as pltpu

_NEG_INF = -1e30


def _round_up(x, m):
    return -(-x // m) * m


# -----------------------------------------------------------------------------
# Fused kernel: conv(all Ks) + mask + max-pool + bias + ReLU + FC -> logits.
#   emb_ref  : (B_TILE, W + k_max - 1, D)  bf16 (time-padded via token pad)
#   wconv_ref: (k_max*D, F)                bf16 im2col weight slab,
#                                          rows k*D:(k+1)*D zero for taps >= K
#   bconv_ref: (1, F)                      f32 conv biases
#   mask_ref : (W, F)                      f32, 0 at valid t, -1e30 at invalid
#   fcw_ref  : (F, C_pad), fcb_ref:(1,C_pad) f32 final linear (lane-dense pad)
#   out_ref  : (B_TILE, C_pad)             f32 logits (padded, sliced outside)
# -----------------------------------------------------------------------------
def _textcnn_fused_kernel(emb_ref, wconv_ref, bconv_ref, mask_ref,
                          fcw_ref, fcb_ref, out_ref, *, k_max, seq_len):
    bt = emb_ref.shape[0]
    d = emb_ref.shape[2]
    f = wconv_ref.shape[1]
    bw = bt * seq_len

    x = emb_ref[...]                                          # bf16, loaded once
    # In-kernel im2col: pack the k_max taps along the contraction axis so the
    # whole multi-kernel-size conv is ONE deep matmul instead of k_max shallow
    # contraction-D matmuls that each re-push the LHS and spill an f32
    # accumulator.
    taps = [x[:, k:k + seq_len, :] for k in range(k_max)]
    lhs = jnp.concatenate(taps, axis=2).reshape(bw, k_max * d)   # (bw, k*D) bf16
    scores = jnp.dot(lhs, wconv_ref[...],
                     preferred_element_type=jnp.float32)         # (bw, F) f32

    # Mask invalid tail positions (also covers pad-token contributions), max
    # over time, then bias + ReLU (both commute with the max), then fused FC.
    scores = scores.reshape(bt, seq_len, f) + mask_ref[...]
    pooled = jnp.max(scores, axis=1)                             # (bt, F)
    pooled = jnp.maximum(pooled + bconv_ref[...], 0.0)           # bias + ReLU
    logits = jnp.dot(pooled, fcw_ref[...],
                     preferred_element_type=jnp.float32) + fcb_ref[...]
    out_ref[...] = logits.astype(out_ref.dtype)


# -----------------------------------------------------------------------------
# Wrapper: fused weight slab / time mask construction + one pallas_call.
# -----------------------------------------------------------------------------
def _prepare_fused(params, W):
    convs = params["convs"]
    k_max = max(K for (K, _, _) in convs)
    D = convs[0][1].shape[1]
    w_blocks, b_blocks, mask_cols = [], [], []
    t = jnp.arange(W)[:, None]                                   # (W, 1)
    for (K, w, b) in convs:                                      # w: (K, D, Co)
        Co = w.shape[2]
        pad = jnp.zeros((k_max - K, D, Co), w.dtype)
        wk = jnp.concatenate([w, pad], axis=0)                   # (k_max, D, Co)
        w_blocks.append(wk.reshape(k_max * D, Co))               # im2col rows
        b_blocks.append(b)                                       # (1, Co)
        valid = t <= (W - K)                                     # (W, 1)
        mask_cols.append(jnp.where(valid, 0.0, _NEG_INF)
                         * jnp.ones((1, Co), jnp.float32))       # (W, Co)
    C = params["fc_w"].shape[1]
    c_pad = _round_up(C, 128)     # lane-dense output block
    fc_w = jnp.pad(params["fc_w"].astype(jnp.float32), ((0, 0), (0, c_pad - C)))
    fc_b = jnp.pad(params["fc_b"].astype(jnp.float32), ((0, 0), (0, c_pad - C)))
    return dict(
        conv_w=jnp.concatenate(w_blocks, axis=1).astype(jnp.bfloat16),
        conv_b=jnp.concatenate(b_blocks, axis=1).astype(jnp.float32),
        time_mask=jnp.concatenate(mask_cols, axis=1).astype(jnp.float32),
        fc_w=fc_w, fc_b=fc_b,
        k_max=k_max, num_labels=C, c_pad=c_pad,
    )


def _textcnn_pallas(emb, fused, *, bt, seq_len):
    """emb: [n_pad, W+k_max-1, D] bf16 -> padded logits [n_pad, C_pad] f32."""
    n_pad, w_pad, D = emb.shape
    conv_w, conv_b = fused["conv_w"], fused["conv_b"]
    mask, fc_w, fc_b = fused["time_mask"], fused["fc_w"], fused["fc_b"]
    kd, F = conv_w.shape
    c_pad = fused["c_pad"]

    kernel = functools.partial(_textcnn_fused_kernel,
                               k_max=fused["k_max"], seq_len=seq_len)
    return pl.pallas_call(
        kernel,
        out_shape=jax.ShapeDtypeStruct((n_pad, c_pad), jnp.float32),
        grid_spec=pltpu.PrefetchScalarGridSpec(
            num_scalar_prefetch=0,
            grid=(n_pad // bt,),
            in_specs=[
                pl.BlockSpec((bt, w_pad, D), lambda n: (n, 0, 0)),
                # Constant-index-map operands: fetched once, held resident.
                pl.BlockSpec((kd, F), lambda n: (0, 0)),
                pl.BlockSpec((1, F), lambda n: (0, 0)),
                pl.BlockSpec((seq_len, F), lambda n: (0, 0)),
                pl.BlockSpec((F, c_pad), lambda n: (0, 0)),
                pl.BlockSpec((1, c_pad), lambda n: (0, 0)),
            ],
            out_specs=pl.BlockSpec((bt, c_pad), lambda n: (n, 0)),
        ),
        compiler_params=pltpu.CompilerParams(
            dimension_semantics=("parallel",),
        ),
    )(emb, conv_w, conv_b, mask, fc_w, fc_b)


def cnn_text_forward(tokens, params, *, b_tile=512):
    N, W = tokens.shape
    fused = _prepare_fused(params, W)
    k_max = fused["k_max"]
    assert W >= k_max, "sequence shorter than largest conv kernel"
    # TODO(synk): add extra masking to support W < max(Ks) if ever needed.

    # Batch tile: big enough to amortize per-step overhead, but >= 2 grid
    # steps once N > 8 so both v7x TensorCores get work (no-op on v5e/v6e).
    bt = min(b_tile, max(8, _round_up((N + 1) // 2, 8)))
    n_pad = _round_up(N, bt)
    w_pad = W + k_max - 1

    # Fold batch pad + (k_max-1) time pad into the tiny int32 token matrix
    # (no HBM round-trip of the full [N, W, D] emb through jnp.pad).  Padded
    # time positions only ever contribute to -1e30-masked score positions;
    # padded batch rows are sliced off below.
    tokens_p = jnp.pad(tokens, ((0, n_pad - N), (0, w_pad - W)))
    # TODO(synk): data-dependent embedding gather kept in plain JAX (not a
    #             rectangular BlockSpec access pattern).
    emb = jnp.take(params["embed"].astype(jnp.bfloat16), tokens_p, axis=0)
    # Dropout: identity at inference (matches nn.Dropout in eval mode).
    logits = _textcnn_pallas(emb, fused, bt=bt, seq_len=W)
    return logits[:N, :fused["num_labels"]]


# -----------------------------------------------------------------------------
# Pure-JAX reference (f32) for a correctness spot-check.
# -----------------------------------------------------------------------------
def cnn_text_reference(tokens, params):
    emb = jnp.take(params["embed"], tokens, axis=0).astype(jnp.float32)
    N, W, _ = emb.shape
    feats = []
    for (K, w, b) in params["convs"]:
        out_pos = W - K + 1
        sc = jnp.zeros((N, out_pos, w.shape[2]), jnp.float32)
        for k in range(K):
            sc = sc + jnp.einsum("nwd,dc->nwc", emb[:, k:k + out_pos, :], w[k])
        sc = jax.nn.relu(sc + b[None])
        feats.append(jnp.max(sc, axis=1))
    x = jnp.concatenate(feats, axis=1)
    return x @ params["fc_w"] + params["fc_b"]


# -----------------------------------------------------------------------------
# Deterministic parameter construction (synthetic, no checkpoint load).
# -----------------------------------------------------------------------------
def make_params(key, V, D, Co, Ks, C):
    keys = jax.random.split(key, 2 + 2 * len(Ks) + 2)
    ki = iter(keys)
    params = {}
    params["embed"] = jax.random.normal(next(ki), (V, D), jnp.float32) * 0.1
    convs = []
    for K in Ks:
        # torch conv weight (Co, 1, K, D) <-> stored here as (K, D, Co)
        w = jax.random.normal(next(ki), (K, D, Co), jnp.float32) * 0.1
        b = jax.random.normal(next(ki), (1, Co), jnp.float32) * 0.1
        convs.append((K, w, b))
    params["convs"] = convs
    F_in = len(Ks) * Co
    params["fc_w"] = jax.random.normal(next(ki), (F_in, C), jnp.float32) * 0.1
    params["fc_b"] = jax.random.normal(next(ki), (1, C), jnp.float32) * 0.1
    return params


if __name__ == "__main__":
    # Small config consistent with the module's forward:
    #   vocab_size=50, embed_dim=32, kernel_num=8, kernel_sizes=(3,4,5), labels=4
    V, D, Co, Ks, C = 50, 32, 8, (3, 4, 5), 4
    N, W = 2, 16  # batch, sequence length

    key = jax.random.PRNGKey(0)
    pkey, xkey = jax.random.split(key)
    params = make_params(pkey, V, D, Co, Ks, C)
    tokens = jax.random.randint(xkey, (N, W), 0, V, dtype=jnp.int32)

    logits = cnn_text_forward(tokens, params)
    jax.block_until_ready(logits)

    assert logits.shape == (N, C) and logits.dtype == jnp.float32
    ref = cnn_text_reference(tokens, params)
    max_err = float(jnp.max(jnp.abs(logits - ref)))
    assert jnp.allclose(logits, ref, atol=2e-2, rtol=2e-2), max_err
    print("KERNEL_OK")
</pallas_src>

<mosaic_0001>
module attributes {stable_mosaic.version = 11 : i64} {
  func.func @_textcnn_fused_kernel(%arg0: i32, %arg1: memref<8x20x32xbf16, #tpu.memory_space<vmem>>, %arg2: memref<160x24xbf16, #tpu.memory_space<vmem>>, %arg3: memref<1x24xf32, #tpu.memory_space<vmem>>, %arg4: memref<16x24xf32, #tpu.memory_space<vmem>>, %arg5: memref<24x128xf32, #tpu.memory_space<vmem>>, %arg6: memref<1x128xf32, #tpu.memory_space<vmem>>, %arg7: memref<8x128xf32, #tpu.memory_space<vmem>>) attributes {dimension_semantics = [#tpu.dimension_semantics<parallel>], iteration_bounds = array<i64: 1>, scalar_prefetch = 0 : i64, scratch_operands = 0 : i64, tpu.core_type = #tpu.core_type<tc>, window_params = [{transform_indices = @transform_0, window_bounds = array<i64: 8, 20, 32>}, {pipeline_mode = #tpu.pipeline_mode<synchronous>, transform_indices = @transform_1, window_bounds = array<i64: 160, 24>}, {pipeline_mode = #tpu.pipeline_mode<synchronous>, transform_indices = @transform_2, window_bounds = array<i64: 1, 24>}, {pipeline_mode = #tpu.pipeline_mode<synchronous>, transform_indices = @transform_3, window_bounds = array<i64: 16, 24>}, {pipeline_mode = #tpu.pipeline_mode<synchronous>, transform_indices = @transform_4, window_bounds = array<i64: 24, 128>}, {pipeline_mode = #tpu.pipeline_mode<synchronous>, transform_indices = @transform_5, window_bounds = array<i64: 1, 128>}, {transform_indices = @transform_6, window_bounds = array<i64: 8, 128>}]} {
    %c0 = arith.constant 0 : index
    %c0_0 = arith.constant 0 : index
    %c0_1 = arith.constant 0 : index
    %0 = vector.load %arg1[%c0, %c0_0, %c0_1] : memref<8x20x32xbf16, #tpu.memory_space<vmem>>, vector<8x20x32xbf16>
    %1 = vector.extract_strided_slice %0 {offsets = [0, 0, 0], sizes = [8, 16, 32], strides = [1, 1, 1]} : vector<8x20x32xbf16> to vector<8x16x32xbf16>
    %2 = vector.extract_strided_slice %0 {offsets = [0, 1, 0], sizes = [8, 16, 32], strides = [1, 1, 1]} : vector<8x20x32xbf16> to vector<8x16x32xbf16>
    %3 = vector.extract_strided_slice %0 {offsets = [0, 2, 0], sizes = [8, 16, 32], strides = [1, 1, 1]} : vector<8x20x32xbf16> to vector<8x16x32xbf16>
    %4 = vector.extract_strided_slice %0 {offsets = [0, 3, 0], sizes = [8, 16, 32], strides = [1, 1, 1]} : vector<8x20x32xbf16> to vector<8x16x32xbf16>
    %5 = vector.extract_strided_slice %0 {offsets = [0, 4, 0], sizes = [8, 16, 32], strides = [1, 1, 1]} : vector<8x20x32xbf16> to vector<8x16x32xbf16>
    %6 = tpu.concatenate %1, %2, %3, %4, %5 in 2 : vector<8x16x32xbf16>, vector<8x16x32xbf16>, vector<8x16x32xbf16>, vector<8x16x32xbf16>, vector<8x16x32xbf16> -> vector<8x16x160xbf16>
    %7 = vector.shape_cast %6 : vector<8x16x160xbf16> to vector<128x160xbf16>
    %c0_2 = arith.constant 0 : index
    %c0_3 = arith.constant 0 : index
    %8 = vector.load %arg2[%c0_2, %c0_3] : memref<160x24xbf16, #tpu.memory_space<vmem>>, vector<160x24xbf16>
    %cst = arith.constant dense<0.000000e+00> : vector<128x24xf32>
    %9 = tpu.matmul %7, %8, %cst {dimension_numbers = #tpu.dot_dimension_numbers<[1], [0], [0], [1], [0, 0, 1, 1], [], []>} : vector<128x160xbf16>, vector<160x24xbf16>, vector<128x24xf32> -> vector<128x24xf32>
    %10 = vector.shape_cast %9 : vector<128x24xf32> to vector<8x16x24xf32>
    %c0_4 = arith.constant 0 : index
    %c0_5 = arith.constant 0 : index
    %11 = vector.load %arg4[%c0_4, %c0_5] : memref<16x24xf32, #tpu.memory_space<vmem>>, vector<16x24xf32>
    %12 = vector.shape_cast %11 : vector<16x24xf32> to vector<1x16x24xf32>
    %13 = vector.broadcast %12 : vector<1x16x24xf32> to vector<8x16x24xf32>
    %14 = arith.addf %10, %13 : vector<8x16x24xf32>
    %cst_6 = arith.constant dense<0xFF800000> : vector<8x24xf32>
    %15 = vector.multi_reduction <maximumf>, %14, %cst_6 [1] : vector<8x16x24xf32> to vector<8x24xf32>
    %c0_7 = arith.constant 0 : index
    %c0_8 = arith.constant 0 : index
    %16 = vector.load %arg3[%c0_7, %c0_8] : memref<1x24xf32, #tpu.memory_space<vmem>>, vector<1x24xf32>
    %17 = vector.broadcast %16 : vector<1x24xf32> to vector<8x24xf32>
    %18 = arith.addf %15, %17 : vector<8x24xf32>
    %cst_9 = arith.constant 0.000000e+00 : f32
    %19 = vector.broadcast %cst_9 : f32 to vector<8x24xf32>
    %20 = arith.maximumf %18, %19 : vector<8x24xf32>
    %c0_10 = arith.constant 0 : index
    %c0_11 = arith.constant 0 : index
    %21 = vector.load %arg5[%c0_10, %c0_11] : memref<24x128xf32, #tpu.memory_space<vmem>>, vector<24x128xf32>
    %cst_12 = arith.constant dense<0.000000e+00> : vector<8x128xf32>
    %22 = tpu.matmul %20, %21, %cst_12 {dimension_numbers = #tpu.dot_dimension_numbers<[1], [0], [0], [1], [0, 0, 1, 1], [], []>} : vector<8x24xf32>, vector<24x128xf32>, vector<8x128xf32> -> vector<8x128xf32>
    %c0_13 = arith.constant 0 : index
    %c0_14 = arith.constant 0 : index
    %23 = vector.load %arg6[%c0_13, %c0_14] : memref<1x128xf32, #tpu.memory_space<vmem>>, vector<1x128xf32>
    %24 = vector.broadcast %23 : vector<1x128xf32> to vector<8x128xf32>
    %25 = arith.addf %22, %24 : vector<8x128xf32>
    %c0_15 = arith.constant 0 : index
    %c0_16 = arith.constant 0 : index
    %26 = vector.load %arg7[%c0_15, %c0_16] : memref<8x128xf32, #tpu.memory_space<vmem>>, vector<8x128xf32>
    tpu.vector_store %arg7[%c0_15, %c0_16], %25 {strides = array<i32>} : memref<8x128xf32, #tpu.memory_space<vmem>>, vector<8x128xf32>,
    return
  }
  func.func @transform_0(%arg0: i32) -> (i32, i32, i32) {
    %c0_i32 = arith.constant 0 : i32
    %c0_i32_0 = arith.constant 0 : i32
    %c0_i32_1 = arith.constant 0 : i32
    return %arg0, %c0_i32, %c0_i32_0 : i32, i32, i32
  }
  func.func @transform_1(%arg0: i32) -> (i32, i32) {
    %c0_i32 = arith.constant 0 : i32
    %c0_i32_0 = arith.constant 0 : i32
    %c0_i32_1 = arith.constant 0 : i32
    return %c0_i32, %c0_i32_0 : i32, i32
  }
  func.func @transform_2(%arg0: i32) -> (i32, i32) {
    %c0_i32 = arith.constant 0 : i32
    %c0_i32_0 = arith.constant 0 : i32
    %c0_i32_1 = arith.constant 0 : i32
    return %c0_i32, %c0_i32_0 : i32, i32
  }
  func.func @transform_3(%arg0: i32) -> (i32, i32) {
    %c0_i32 = arith.constant 0 : i32
    %c0_i32_0 = arith.constant 0 : i32
    %c0_i32_1 = arith.constant 0 : i32
    return %c0_i32, %c0_i32_0 : i32, i32
  }
  func.func @transform_4(%arg0: i32) -> (i32, i32) {
    %c0_i32 = arith.constant 0 : i32
    %c0_i32_0 = arith.constant 0 : i32
    %c0_i32_1 = arith.constant 0 : i32
    return %c0_i32, %c0_i32_0 : i32, i32
  }
  func.func @transform_5(%arg0: i32) -> (i32, i32) {
    %c0_i32 = arith.constant 0 : i32
    %c0_i32_0 = arith.constant 0 : i32
    %c0_i32_1 = arith.constant 0 : i32
    return %c0_i32, %c0_i32_0 : i32, i32
  }
  func.func @transform_6(%arg0: i32) -> (i32, i32) {
    %c0_i32 = arith.constant 0 : i32
    %c0_i32_0 = arith.constant 0 : i32
    return %arg0, %c0_i32 : i32, i32
  }
}

</mosaic_0001>

<llo_original>
// kernel: tpu_custom_call.1
$region0: #{tpu_custom_call.1}
  #allocation0 [shape = 'u32[]', space=smem, size = 0x4, offset = 0x4, fixed_abs, tag = 'smem constant byte address 0x4 - core index']
  #allocation1 [shape = 'u32[144,128]{1,0:T(1,128)}', space=vmem, size = 0x12000, scoped, tag = 'internal scratch']
  %s0 = inlined_call_operand.vmem [shape: bf16[8,20,32], index: 0, kind: input, shape index: {}]
  %s1 = inlined_call_operand.vmem [shape: bf16[160,24], index: 1, kind: input, shape index: {}]
  %s2 = inlined_call_operand.vmem [shape: f32[1,24], index: 2, kind: input, shape index: {}]
  %s3 = inlined_call_operand.vmem [shape: f32[16,24], index: 3, kind: input, shape index: {}]
  %s4 = inlined_call_operand.vmem [shape: f32[24,128], index: 4, kind: input, shape index: {}]
  %s5 = inlined_call_operand.vmem [shape: f32[1,128], index: 5, kind: input, shape index: {}]
  %s6 = inlined_call_operand.hbm [shape: f32[8,128], index: 6, kind: output, shape index: {}]
  %s7 = sld [smem:[#allocation0]]
  $region34: #{tpu_custom_call.1} parent=0
    _
  %s9 = ssub.s32 1, %s7
  %s10 = scalar_select 0, %s9, %s7
  $region1: #{tpu_custom_call.1} parent=0
    #allocation2 [shape = 'u8[4096]{0}', space=vmem, size = 0x1000, scoped, tag = 'output window, operand 0, single buffered']
    #allocation3 [shape = 's32[1]{0}', space=sflag, size = 0x4, scoped, tag = 'scoped memory for tpu_custom_call.1']
    %11 = vsyncpa [#allocation3], 0
    // Predicated region
    $region2: #{tpu_custom_call.1} parent=1 // pred_check
      _
    $region3: #{tpu_custom_call.1} parent=1 // pred_check_branch
      %13 = sbr.rel (0) target = $region5
    $region4: #{tpu_custom_call.1} parent=1 // pred_region
      _
    $region5: #{tpu_custom_call.1} parent=1 // pred_fallthru
      _
    // Predicated region
    $region6: #{tpu_custom_call.1} parent=1 // pred_check
      _
    $region7: #{tpu_custom_call.1} parent=1 // pred_check_branch
      %15 = sbr.rel (0) target = $region9
    $region8: #{tpu_custom_call.1} parent=1 // pred_region
      _
    $region9: #{tpu_custom_call.1} parent=1 // pred_fallthru
      _
    // Predicated region
    $region10: #{tpu_custom_call.1} parent=1 // pred_check
      _
    $region11: #{tpu_custom_call.1} parent=1 // pred_check_branch
      %17 = sbr.rel (0) target = $region13
    $region12: #{tpu_custom_call.1} parent=1 // pred_region
      _
    $region13: #{tpu_custom_call.1} parent=1 // pred_fallthru
      _
    // Predicated region
    $region14: #{tpu_custom_call.1} parent=1 // pred_check
      _
    $region15: #{tpu_custom_call.1} parent=1 // pred_check_branch
      %19 = sbr.rel (0) target = $region17
    $region16: #{tpu_custom_call.1} parent=1 // pred_region
      _
    $region17: #{tpu_custom_call.1} parent=1 // pred_fallthru
      _
    // Predicated region
    $region18: #{tpu_custom_call.1} parent=1 // pred_check
      _
    $region19: #{tpu_custom_call.1} parent=1 // pred_check_branch
      %21 = sbr.rel (0) target = $region21
    $region20: #{tpu_custom_call.1} parent=1 // pred_region
      _
    $region21: #{tpu_custom_call.1} parent=1 // pred_fallthru
      _
    // Predicated region
    $region22: #{tpu_custom_call.1} parent=1 // pred_check
      _
    $region23: #{tpu_custom_call.1} parent=1 // pred_check_branch
      %23 = sbr.rel (0) target = $region25
    $region24: #{tpu_custom_call.1} parent=1 // pred_region
      _
    $region25: #{tpu_custom_call.1} parent=1 // pred_fallthru
      _
    %v25 = vld [vmem:[%s0] sm:$0xf]
    %v26 = vld [vmem:[%s0 + $0x4] sm:$0xf]
    %v27 = vld [vmem:[%s0 + $0x8] sm:$0x3]
    %v28 = vld [vmem:[%s0 + $0xc] sm:$0xf]
    %v29 = vld [vmem:[%s0 + $0x10] sm:$0xf]
    %v30 = vld [vmem:[%s0 + $0x14] sm:$0x3]
    %v31 = vld [vmem:[%s0 + $0x18] sm:$0xf]
    %v32 = vld [vmem:[%s0 + $0x1c] sm:$0xf]
    %v33 = vld [vmem:[%s0 + $0x20] sm:$0x3]
    %v34 = vld [vmem:[%s0 + $0x24] sm:$0xf]
    %v35 = vld [vmem:[%s0 + $0x28] sm:$0xf]
    %v36 = vld [vmem:[%s0 + $0x2c] sm:$0x3]
    %v37 = vld [vmem:[%s0 + $0x30] sm:$0xf]
    %v38 = vld [vmem:[%s0 + $0x34] sm:$0xf]
    %v39 = vld [vmem:[%s0 + $0x38] sm:$0x3]
    %v40 = vld [vmem:[%s0 + $0x3c] sm:$0xf]
    %v41 = vld [vmem:[%s0 + $0x40] sm:$0xf]
    %v42 = vld [vmem:[%s0 + $0x44] sm:$0x3]
    %v43 = vld [vmem:[%s0 + $0x48] sm:$0xf]
    %v44 = vld [vmem:[%s0 + $0x4c] sm:$0xf]
    %v45 = vld [vmem:[%s0 + $0x50] sm:$0x3]
    %v46 = vld [vmem:[%s0 + $0x54] sm:$0xf]
    %v47 = vld [vmem:[%s0 + $0x58] sm:$0xf]
    %v48 = vld [vmem:[%s0 + $0x5c] sm:$0x3]
    %v65 = vunpack.c.l.b16 %v25
    %v66 = vunpack.c.l.b16 %v26
    %v67 = vunpack.c.l.b16 %v28
    %v68 = vunpack.c.l.b16 %v29
    %v69 = vunpack.c.l.b16 %v31
    %v70 = vunpack.c.l.b16 %v32
    %v71 = vunpack.c.l.b16 %v34
    %v72 = vunpack.c.l.b16 %v35
    %v73 = vunpack.c.l.b16 %v37
    %v74 = vunpack.c.l.b16 %v38
    %v75 = vunpack.c.l.b16 %v40
    %v76 = vunpack.c.l.b16 %v41
    %v77 = vunpack.c.l.b16 %v43
    %v78 = vunpack.c.l.b16 %v44
    %v79 = vunpack.c.l.b16 %v46
    %v80 = vunpack.c.l.b16 %v47
    %v81 = vpack.c.b16 %v66, %v65
    %v82 = vpack.c.b16 %v68, %v67
    %v83 = vpack.c.b16 %v70, %v69
    %v84 = vpack.c.b16 %v72, %v71
    %v85 = vpack.c.b16 %v74, %v73
    %v86 = vpack.c.b16 %v76, %v75
    %v87 = vpack.c.b16 %v78, %v77
    %v88 = vpack.c.b16 %v80, %v79
    %v97 = vunpack.c.l.b16 %v27
    %v98 = vunpack.c.l.b16 %v30
    %v99 = vunpack.c.l.b16 %v33
    %v100 = vunpack.c.l.b16 %v36
    %v101 = vunpack.c.l.b16 %v39
    %v102 = vunpack.c.l.b16 %v42
    %v103 = vunpack.c.l.b16 %v45
    %v104 = vunpack.c.l.b16 %v48
    %v105 = vpack.c.b16 %v97, %v97
    %v106 = vpack.c.b16 %v98, %v98
    %v107 = vpack.c.b16 %v99, %v99
    %v108 = vpack.c.b16 %v100, %v100
    %v109 = vpack.c.b16 %v101, %v101
    %v110 = vpack.c.b16 %v102, %v102
    %v111 = vpack.c.b16 %v103, %v103
    %v112 = vpack.c.b16 %v104, %v104
    %vm113 = vsmask.f32 7424
    %v115 = vshrl.u32 %v81, 16
    %v117 = vshll.u32 %v81, 16
    %v119 = vrot.slane %v117, 1
    %v120 = vor.u32 %v115, %v119
    %v122 = vshll.u32 %v105, 16
    %v124 = vrot.slane %v122, 1
    %v125 = vsel %vm113, %v120, %v124
    %v127 = vshrl.u32 %v82, 16
    %v129 = vshll.u32 %v82, 16
    %v131 = vrot.slane %v129, 1
    %v132 = vor.u32 %v127, %v131
    %v134 = vshll.u32 %v106, 16
    %v136 = vrot.slane %v134, 1
    %v137 = vsel %vm113, %v132, %v136
    %v139 = vshrl.u32 %v83, 16
    %v141 = vshll.u32 %v83, 16
    %v143 = vrot.slane %v141, 1
    %v144 = vor.u32 %v139, %v143
    %v146 = vshll.u32 %v107, 16
    %v148 = vrot.slane %v146, 1
    %v149 = vsel %vm113, %v144, %v148
    %v151 = vshrl.u32 %v84, 16
    %v153 = vshll.u32 %v84, 16
    %v155 = vrot.slane %v153, 1
    %v156 = vor.u32 %v151, %v155
    %v158 = vshll.u32 %v108, 16
    %v160 = vrot.slane %v158, 1
    %v161 = vsel %vm113, %v156, %v160
    %v163 = vshrl.u32 %v85, 16
    %v165 = vshll.u32 %v85, 16
    %v167 = vrot.slane %v165, 1
    %v168 = vor.u32 %v163, %v167
    %v170 = vshll.u32 %v109, 16
    %v172 = vrot.slane %v170, 1
    %v173 = vsel %vm113, %v168, %v172
    %v175 = vshrl.u32 %v86, 16
    %v177 = vshll.u32 %v86, 16
    %v179 = vrot.slane %v177, 1
    %v180 = vor.u32 %v175, %v179
    %v182 = vshll.u32 %v110, 16
    %v184 = vrot.slane %v182, 1
    %v185 = vsel %vm113, %v180, %v184
    %v187 = vshrl.u32 %v87, 16
    %v189 = vshll.u32 %v87, 16
    %v191 = vrot.slane %v189, 1
    %v192 = vor.u32 %v187, %v191
    %v194 = vshll.u32 %v111, 16
    %v196 = vrot.slane %v194, 1
    %v197 = vsel %vm113, %v192, %v196
    %v199 = vshrl.u32 %v88, 16
    %v201 = vshll.u32 %v88, 16
    %v203 = vrot.slane %v201, 1
    %v204 = vor.u32 %v199, %v203
    %v206 = vshll.u32 %v112, 16
    %v208 = vrot.slane %v206, 1
    %v209 = vsel %vm113, %v204, %v208
    %210 = vrot.lane.b32.xlu0 %v125, 32
    %v211 = vpop.permute.xlu0 %210
    %212 = vrot.lane.b32.xlu0 %v137, 32
    %v213 = vpop.permute.xlu0 %212
    %214 = vrot.lane.b32.xlu0 %v149, 32
    %v215 = vpop.permute.xlu0 %214
    %216 = vrot.lane.b32.xlu0 %v161, 32
    %v217 = vpop.permute.xlu0 %216
    %218 = vrot.lane.b32.xlu0 %v173, 32
    %v219 = vpop.permute.xlu0 %218
    %220 = vrot.lane.b32.xlu0 %v185, 32
    %v221 = vpop.permute.xlu0 %220
    %222 = vrot.lane.b32.xlu0 %v197, 32
    %v223 = vpop.permute.xlu0 %222
    %224 = vrot.lane.b32.xlu0 %v209, 32
    %v225 = vpop.permute.xlu0 %224
    %vm226 = vcmask 1046528
    %v227 = vrot.slane %v81, 1
    %v228 = vrot.slane %v105, 1
    %v229 = vsel %vm226, %v227, %v228
    %v230 = vrot.slane %v82, 1
    %v231 = vrot.slane %v106, 1
    %v232 = vsel %vm226, %v230, %v231
    %v233 = vrot.slane %v83, 1
    %v234 = vrot.slane %v107, 1
    %v235 = vsel %vm226, %v233, %v234
    %v236 = vrot.slane %v84, 1
    %v237 = vrot.slane %v108, 1
    %v238 = vsel %vm226, %v236, %v237
    %v239 = vrot.slane %v85, 1
    %v240 = vrot.slane %v109, 1
    %v241 = vsel %vm226, %v239, %v240
    %v242 = vrot.slane %v86, 1
    %v243 = vrot.slane %v110, 1
    %v244 = vsel %vm226, %v242, %v243
    %v245 = vrot.slane %v87, 1
    %v246 = vrot.slane %v111, 1
    %v247 = vsel %vm226, %v245, %v246
    %v248 = vrot.slane %v88, 1
    %v249 = vrot.slane %v112, 1
    %v250 = vsel %vm226, %v248, %v249
    %251 = vrot.lane.b32.xlu0 %v229, 64
    %v252 = vpop.permute.xlu0 %251
    %253 = vrot.lane.b32.xlu0 %v232, 64
    %v254 = vpop.permute.xlu0 %253
    %255 = vrot.lane.b32.xlu0 %v235, 64
    %v256 = vpop.permute.xlu0 %255
    %257 = vrot.lane.b32.xlu0 %v238, 64
    %v258 = vpop.permute.xlu0 %257
    %259 = vrot.lane.b32.xlu0 %v241, 64
    %v260 = vpop.permute.xlu0 %259
    %261 = vrot.lane.b32.xlu0 %v244, 64
    %v262 = vpop.permute.xlu0 %261
    %263 = vrot.lane.b32.xlu0 %v247, 64
    %v264 = vpop.permute.xlu0 %263
    %265 = vrot.lane.b32.xlu0 %v250, 64
    %v266 = vpop.permute.xlu0 %265
    %vm267 = vsmask.f32 6400
    %v268 = vrot.slane %v115, 1
    %v269 = vrot.slane %v117, 2
    %v270 = vor.u32 %v268, %v269
    %v271 = vshrl.u32 %v105, 16
    %v273 = vrot.slane %v271, 1
    %v274 = vrot.slane %v122, 2
    %v275 = vor.u32 %v273, %v274
    %v276 = vsel %vm267, %v270, %v275
    %v277 = vrot.slane %v127, 1
    %v278 = vrot.slane %v129, 2
    %v279 = vor.u32 %v277, %v278
    %v280 = vshrl.u32 %v106, 16
    %v282 = vrot.slane %v280, 1
    %v283 = vrot.slane %v134, 2
    %v284 = vor.u32 %v282, %v283
    %v285 = vsel %vm267, %v279, %v284
    %v286 = vrot.slane %v139, 1
    %v287 = vrot.slane %v141, 2
    %v288 = vor.u32 %v286, %v287
    %v289 = vshrl.u32 %v107, 16
    %v291 = vrot.slane %v289, 1
    %v292 = vrot.slane %v146, 2
    %v293 = vor.u32 %v291, %v292
    %v294 = vsel %vm267, %v288, %v293
    %v295 = vrot.slane %v151, 1
    %v296 = vrot.slane %v153, 2
    %v297 = vor.u32 %v295, %v296
    %v298 = vshrl.u32 %v108, 16
    %v300 = vrot.slane %v298, 1
    %v301 = vrot.slane %v158, 2
    %v302 = vor.u32 %v300, %v301
    %v303 = vsel %vm267, %v297, %v302
    %v304 = vrot.slane %v163, 1
    %v305 = vrot.slane %v165, 2
    %v306 = vor.u32 %v304, %v305
    %v307 = vshrl.u32 %v109, 16
    %v309 = vrot.slane %v307, 1
    %v310 = vrot.slane %v170, 2
    %v311 = vor.u32 %v309, %v310
    %v312 = vsel %vm267, %v306, %v311
    %v313 = vrot.slane %v175, 1
    %v314 = vrot.slane %v177, 2
    %v315 = vor.u32 %v313, %v314
    %v316 = vshrl.u32 %v110, 16
    %v318 = vrot.slane %v316, 1
    %v319 = vrot.slane %v182, 2
    %v320 = vor.u32 %v318, %v319
    %v321 = vsel %vm267, %v315, %v320
    %v322 = vrot.slane %v187, 1
    %v323 = vrot.slane %v189, 2
    %v324 = vor.u32 %v322, %v323
    %v325 = vshrl.u32 %v111, 16
    %v327 = vrot.slane %v325, 1
    %v328 = vrot.slane %v194, 2
    %v329 = vor.u32 %v327, %v328
    %v330 = vsel %vm267, %v324, %v329
    %v331 = vrot.slane %v199, 1
    %v332 = vrot.slane %v201, 2
    %v333 = vor.u32 %v331, %v332
    %v334 = vshrl.u32 %v112, 16
    %v336 = vrot.slane %v334, 1
    %v337 = vrot.slane %v206, 2
    %v338 = vor.u32 %v336, %v337
    %v339 = vsel %vm267, %v333, %v338
    %340 = vrot.lane.b32.xlu0 %v276, 96
    %v341 = vpop.permute.xlu0 %340
    %342 = vrot.lane.b32.xlu0 %v285, 96
    %v343 = vpop.permute.xlu0 %342
    %344 = vrot.lane.b32.xlu0 %v294, 96
    %v345 = vpop.permute.xlu0 %344
    %346 = vrot.lane.b32.xlu0 %v303, 96
    %v347 = vpop.permute.xlu0 %346
    %348 = vrot.lane.b32.xlu0 %v312, 96
    %v349 = vpop.permute.xlu0 %348
    %350 = vrot.lane.b32.xlu0 %v321, 96
    %v351 = vpop.permute.xlu0 %350
    %352 = vrot.lane.b32.xlu0 %v330, 96
    %v353 = vpop.permute.xlu0 %352
    %354 = vrot.lane.b32.xlu0 %v339, 96
    %v355 = vpop.permute.xlu0 %354
    %vm356 = vcmask 1045504
    %v357 = vrot.slane %v81, 2
    %v358 = vrot.slane %v105, 2
    %v359 = vsel %vm356, %v357, %v358
    %v360 = vrot.slane %v82, 2
    %v361 = vrot.slane %v106, 2
    %v362 = vsel %vm356, %v360, %v361
    %v363 = vrot.slane %v83, 2
    %v364 = vrot.slane %v107, 2
    %v365 = vsel %vm356, %v363, %v364
    %v366 = vrot.slane %v84, 2
    %v367 = vrot.slane %v108, 2
    %v368 = vsel %vm356, %v366, %v367
    %v369 = vrot.slane %v85, 2
    %v370 = vrot.slane %v109, 2
    %v371 = vsel %vm356, %v369, %v370
    %v372 = vrot.slane %v86, 2
    %v373 = vrot.slane %v110, 2
    %v374 = vsel %vm356, %v372, %v373
    %v375 = vrot.slane %v87, 2
    %v376 = vrot.slane %v111, 2
    %v377 = vsel %vm356, %v375, %v376
    %v378 = vrot.slane %v88, 2
    %v379 = vrot.slane %v112, 2
    %v380 = vsel %vm356, %v378, %v379
    %vm381 = vcmask 261120
    %v383 = vsel %vm381, %v81, %v211
    %v385 = vsel %vm381, %v82, %v213
    %v387 = vsel %vm381, %v83, %v215
    %v389 = vsel %vm381, %v84, %v217
    %v391 = vsel %vm381, %v85, %v219
    %v393 = vsel %vm381, %v86, %v221
    %v395 = vsel %vm381, %v87, %v223
    %v397 = vsel %vm381, %v88, %v225
    %vm398 = vcmask 523264
    %v400 = vsel %vm398, %v383, %v252
    %v402 = vsel %vm398, %v385, %v254
    %v404 = vsel %vm398, %v387, %v256
    %v406 = vsel %vm398, %v389, %v258
    %v408 = vsel %vm398, %v391, %v260
    %v410 = vsel %vm398, %v393, %v262
    %v412 = vsel %vm398, %v395, %v264
    %v414 = vsel %vm398, %v397, %v266
    %vm415 = vcmask 785408
    %v417 = vsel %vm415, %v400, %v341
    %v420 = vsel %vm415, %v402, %v343
    %v423 = vsel %vm415, %v404, %v345
    %v426 = vsel %vm415, %v406, %v347
    %v429 = vsel %vm415, %v408, %v349
    %v432 = vsel %vm415, %v410, %v351
    %v435 = vsel %vm415, %v412, %v353
    %v438 = vsel %vm415, %v414, %v355
    %v440 = vld [vmem:[%s1] sm:$0xf]
    %v441 = vld [vmem:[%s1 + $0x4] sm:$0xf]
    %v442 = vld [vmem:[%s1 + $0x8] sm:$0xf]
    %v443 = vld [vmem:[%s1 + $0xc] sm:$0xf]
    %v444 = vld [vmem:[%s1 + $0x10] sm:$0xf]
    %v445 = vld [vmem:[%s1 + $0x14] sm:$0xf]
    %v446 = vld [vmem:[%s1 + $0x18] sm:$0xf]
    %v447 = vld [vmem:[%s1 + $0x1c] sm:$0xf]
    %v448 = vld [vmem:[%s1 + $0x20] sm:$0xf]
    %v449 = vld [vmem:[%s1 + $0x24] sm:$0xf]
    %v450 = vld [vmem:[%s1 + $0x28] sm:$0xf]
    %v451 = vld [vmem:[%s1 + $0x2c] sm:$0xf]
    %v452 = vld [vmem:[%s1 + $0x30] sm:$0xf]
    %v453 = vld [vmem:[%s1 + $0x34] sm:$0xf]
    %v454 = vld [vmem:[%s1 + $0x38] sm:$0xf]
    %v455 = vld [vmem:[%s1 + $0x3c] sm:$0xf]
    %v456 = vld [vmem:[%s1 + $0x40] sm:$0xf]
    %v457 = vld [vmem:[%s1 + $0x44] sm:$0xf]
    %v458 = vld [vmem:[%s1 + $0x48] sm:$0xf]
    %v459 = vld [vmem:[%s1 + $0x4c] sm:$0xf]
    %v480 = vunpack.c.l.b16 %v440
    %v481 = vunpack.c.l.b16 %v441
    %v482 = vunpack.c.l.b16 %v442
    %v483 = vunpack.c.l.b16 %v443
    %v484 = vunpack.c.l.b16 %v444
    %v485 = vunpack.c.l.b16 %v445
    %v486 = vunpack.c.l.b16 %v446
    %v487 = vunpack.c.l.b16 %v447
    %v488 = vunpack.c.l.b16 %v448
    %v489 = vunpack.c.l.b16 %v449
    %v490 = vunpack.c.l.b16 %v450
    %v491 = vunpack.c.l.b16 %v451
    %v492 = vunpack.c.l.b16 %v452
    %v493 = vunpack.c.l.b16 %v453
    %v494 = vunpack.c.l.b16 %v454
    %v495 = vunpack.c.l.b16 %v455
    %v496 = vunpack.c.l.b16 %v456
    %v497 = vunpack.c.l.b16 %v457
    %v498 = vunpack.c.l.b16 %v458
    %v499 = vunpack.c.l.b16 %v459
    %v500 = vpack.c.b16 %v481, %v480
    %v501 = vpack.c.b16 %v483, %v482
    %v502 = vpack.c.b16 %v485, %v484
    %v503 = vpack.c.b16 %v487, %v486
    %v504 = vpack.c.b16 %v489, %v488
    %v505 = vpack.c.b16 %v491, %v490
    %v506 = vpack.c.b16 %v493, %v492
    %v507 = vpack.c.b16 %v495, %v494
    %v508 = vpack.c.b16 %v497, %v496
    %v509 = vpack.c.b16 %v499, %v498
    %v521 = vsel %vm381, %v359, 0
    %v524 = vsel %vm381, %v362, 0
    %v527 = vsel %vm381, %v365, 0
    %v530 = vsel %vm381, %v368, 0
    %v533 = vsel %vm381, %v371, 0
    %v536 = vsel %vm381, %v374, 0
    %v539 = vsel %vm381, %v377, 0
    %v542 = vsel %vm381, %v380, 0
    %544 = vmatprep.subr.bf16.mxu0 0
    %545 = vmatpush1.bf16.msra.mxu0 %v500
    %546 = vmatprep.subr.bf16.mxu0 0
    %547 = vmatpush1.bf16.msra.mxu0 %v501
    %548 = vmatprep.subr.bf16.mxu0 0
    %549 = vmatpush1.bf16.msra.mxu0 %v502
    %550 = vmatprep.subr.bf16.mxu0 0
    %551 = vmatpush1.bf16.msra.mxu0 %v503
    %552 = vmatprep.subr.bf16.mxu0 0
    %553 = vmatpush1.bf16.msra.mxu0 %v504
    %554 = vmatprep.subr.bf16.mxu0 0
    %555 = vmatpush1.bf16.msra.mxu0 %v505
    %556 = vmatprep.subr.bf16.mxu0 0
    %557 = vmatpush1.bf16.msra.mxu0 %v506
    %558 = vmatprep.subr.bf16.mxu0 0
    %559 = vmatpush1.bf16.msra.mxu0 %v507
    %560 = vmatprep.subr.bf16.mxu0 0
    %561 = vmatpush1.bf16.msra.mxu0 %v508
    %562 = vmatprep.subr.bf16.mxu0 0
    %563 = vmatpush1.bf16.msra.mxu0 %v509
    %564 = vmatprep.subr.bf16.mxu0 0
    %565 = vmatpush1.bf16.msra.mxu0 0
    %566 = vmatprep.subr.bf16.mxu0 0
    %567 = vmatpush1.bf16.msra.mxu0 0
    %568 = vmatprep.subr.bf16.mxu0 0
    %569 = vmatpush1.bf16.msra.mxu0 0
    %570 = vmatprep.subr.bf16.mxu0 0
    %571 = vmatpush1.bf16.msra.mxu0 0
    %572 = vmatprep.subr.bf16.mxu0 0
    %573 = vmatpush1.bf16.msra.mxu0 0
    %574 = vmatprep.subr.bf16.mxu0 0
    %575 = vmatpush1.bf16.msra.mxu0 0
    %576 = vmatprep.mubr.bf16.mxu0 %v521
    %577 = vmatmul.mubr.bf16.gmra.mrb[0].mxu0 %v417
    %v578 = vpop.f32.mrb[0].mxu0
    %v579 = vadd.f32 0.0, %v578
    %v580 = vpop.f32.mrb[0].mxu0
    %v581 = vpop.f32.mrb[0].mxu0
    %v582 = vadd.f32 0.0, %v581
    %v583 = vpop.f32.mrb[0].mxu0
    %584 = vmatprep.mubr.bf16.mxu0 %v524
    %585 = vmatmul.mubr.bf16.gmra.mrb[0].mxu0 %v420
    %v586 = vpop.f32.mrb[0].mxu0
    %v587 = vadd.f32 0.0, %v586
    %v588 = vpop.f32.mrb[0].mxu0
    %v589 = vpop.f32.mrb[0].mxu0
    %v590 = vadd.f32 0.0, %v589
    %v591 = vpop.f32.mrb[0].mxu0
    %592 = vmatprep.mubr.bf16.mxu0 %v527
    %593 = vmatmul.mubr.bf16.gmra.mrb[0].mxu0 %v423
    %v594 = vpop.f32.mrb[0].mxu0
    %v595 = vadd.f32 0.0, %v594
    %v596 = vpop.f32.mrb[0].mxu0
    %v597 = vpop.f32.mrb[0].mxu0
    %v598 = vadd.f32 0.0, %v597
    %v599 = vpop.f32.mrb[0].mxu0
    %600 = vmatprep.mubr.bf16.mxu0 %v530
    %601 = vmatmul.mubr.bf16.gmra.mrb[0].mxu0 %v426
    %v602 = vpop.f32.mrb[0].mxu0
    %v603 = vadd.f32 0.0, %v602
    %v604 = vpop.f32.mrb[0].mxu0
    %v605 = vpop.f32.mrb[0].mxu0
    %v606 = vadd.f32 0.0, %v605
    %v607 = vpop.f32.mrb[0].mxu0
    %608 = vmatprep.mubr.bf16.mxu0 %v533
    %609 = vmatmul.mubr.bf16.gmra.mrb[0].mxu0 %v429
    %v610 = vpop.f32.mrb[0].mxu0
    %v611 = vadd.f32 0.0, %v610
    %v612 = vpop.f32.mrb[0].mxu0
    %v613 = vpop.f32.mrb[0].mxu0
    %v614 = vadd.f32 0.0, %v613
    %v615 = vpop.f32.mrb[0].mxu0
    %616 = vmatprep.mubr.bf16.mxu0 %v536
    %617 = vmatmul.mubr.bf16.gmra.mrb[0].mxu0 %v432
    %v618 = vpop.f32.mrb[0].mxu0
    %v619 = vadd.f32 0.0, %v618
    %v620 = vpop.f32.mrb[0].mxu0
    %v621 = vpop.f32.mrb[0].mxu0
    %v622 = vadd.f32 0.0, %v621
    %v623 = vpop.f32.mrb[0].mxu0
    %624 = vmatprep.mubr.bf16.mxu0 %v539
    %625 = vmatmul.mubr.bf16.gmra.mrb[0].mxu0 %v435
    %v626 = vpop.f32.mrb[0].mxu0
    %v627 = vadd.f32 0.0, %v626
    %v628 = vpop.f32.mrb[0].mxu0
    %v629 = vpop.f32.mrb[0].mxu0
    %v630 = vadd.f32 0.0, %v629
    %v631 = vpop.f32.mrb[0].mxu0
    %632 = vmatprep.mubr.bf16.mxu0 %v542
    %633 = vmatmul.mubr.bf16.gmra.mrb[0].mxu0 %v438
    %v634 = vpop.f32.mrb[0].mxu0
    %v635 = vadd.f32 0.0, %v634
    %v636 = vpop.f32.mrb[0].mxu0
    %v637 = vpop.f32.mrb[0].mxu0
    %v638 = vadd.f32 0.0, %v637
    %v639 = vpop.f32.mrb[0].mxu0
    %640 = vdwg.mxu0
    %v641 = vld [vmem:[%s3] sm:$0xff]
    %v642 = vld [vmem:[%s3 + $0x8] sm:$0xff]
    %v643 = vadd.f32 %v579, %v641
    %v644 = vadd.f32 %v582, %v642
    %v645 = vadd.f32 %v587, %v641
    %v646 = vadd.f32 %v590, %v642
    %v647 = vadd.f32 %v595, %v641
    %v648 = vadd.f32 %v598, %v642
    %v649 = vadd.f32 %v603, %v641
    %v650 = vadd.f32 %v606, %v642
    %v651 = vadd.f32 %v611, %v641
    %v652 = vadd.f32 %v614, %v642
    %v653 = vadd.f32 %v619, %v641
    %v654 = vadd.f32 %v622, %v642
    %v655 = vadd.f32 %v627, %v641
    %v656 = vadd.f32 %v630, %v642
    %v657 = vadd.f32 %v635, %v641
    %v658 = vadd.f32 %v638, %v642
    %vm659 = vcmask 195584
    %v660 = vsel %vm659, %v643, -inf
    %v661 = vsel %vm659, %v644, -inf
    %v662 = vmax.f32 %v660, %v661
    %v663 = vrot.slane %v662, 4
    %v664 = vmax.f32 %v662, %v663
    %v665 = vrot.slane %v664, 2
    %v666 = vmax.f32 %v664, %v665
    %v667 = vrot.slane %v666, 1
    %v668 = vmax.f32 %v666, %v667
    %v669 = vsel %vm659, %v645, -inf
    %v670 = vsel %vm659, %v646, -inf
    %v671 = vmax.f32 %v669, %v670
    %v672 = vrot.slane %v671, 4
    %v673 = vmax.f32 %v671, %v672
    %v674 = vrot.slane %v673, 2
    %v675 = vmax.f32 %v673, %v674
    %v676 = vrot.slane %v675, 1
    %v677 = vmax.f32 %v675, %v676
    %v678 = vsel %vm659, %v647, -inf
    %v679 = vsel %vm659, %v648, -inf
    %v680 = vmax.f32 %v678, %v679
    %v681 = vrot.slane %v680, 4
    %v682 = vmax.f32 %v680, %v681
    %v683 = vrot.slane %v682, 2
    %v684 = vmax.f32 %v682, %v683
    %v685 = vrot.slane %v684, 1
    %v686 = vmax.f32 %v684, %v685
    %v687 = vsel %vm659, %v649, -inf
    %v688 = vsel %vm659, %v650, -inf
    %v689 = vmax.f32 %v687, %v688
    %v690 = vrot.slane %v689, 4
    %v691 = vmax.f32 %v689, %v690
    %v692 = vrot.slane %v691, 2
    %v693 = vmax.f32 %v691, %v692
    %v694 = vrot.slane %v693, 1
    %v695 = vmax.f32 %v693, %v694
    %v696 = vsel %vm659, %v651, -inf
    %v697 = vsel %vm659, %v652, -inf
    %v698 = vmax.f32 %v696, %v697
    %v699 = vrot.slane %v698, 4
    %v700 = vmax.f32 %v698, %v699
    %v701 = vrot.slane %v700, 2
    %v702 = vmax.f32 %v700, %v701
    %v703 = vrot.slane %v702, 1
    %v704 = vmax.f32 %v702, %v703
    %v705 = vsel %vm659, %v653, -inf
    %v706 = vsel %vm659, %v654, -inf
    %v707 = vmax.f32 %v705, %v706
    %v708 = vrot.slane %v707, 4
    %v709 = vmax.f32 %v707, %v708
    %v710 = vrot.slane %v709, 2
    %v711 = vmax.f32 %v709, %v710
    %v712 = vrot.slane %v711, 1
    %v713 = vmax.f32 %v711, %v712
    %v714 = vsel %vm659, %v655, -inf
    %v715 = vsel %vm659, %v656, -inf
    %v716 = vmax.f32 %v714, %v715
    %v717 = vrot.slane %v716, 4
    %v718 = vmax.f32 %v716, %v717
    %v719 = vrot.slane %v718, 2
    %v720 = vmax.f32 %v718, %v719
    %v721 = vrot.slane %v720, 1
    %v722 = vmax.f32 %v720, %v721
    %v723 = vsel %vm659, %v657, -inf
    %v724 = vsel %vm659, %v658, -inf
    %v725 = vmax.f32 %v723, %v724
    %v726 = vrot.slane %v725, 4
    %v727 = vmax.f32 %v725, %v726
    %v728 = vrot.slane %v727, 2
    %v729 = vmax.f32 %v727, %v728
    %v730 = vrot.slane %v729, 1
    %v731 = vmax.f32 %v729, %v730
    %v732 = vld [vmem:[%s2] sm:$0x1]
    %v734 = vlaneseq
    %v735 = vshrl.u32 %v734, 7
    %v736 = vsub.s32 0, %v735
    %v737 = vrot.slane %v732, %v736
    %v739 = vadd.f32 %v668, %v737
    %v740 = vadd.f32 %v677, %v737
    %v741 = vadd.f32 %v686, %v737
    %v742 = vadd.f32 %v695, %v737
    %v743 = vadd.f32 %v704, %v737
    %v744 = vadd.f32 %v713, %v737
    %v745 = vadd.f32 %v722, %v737
    %v746 = vadd.f32 %v731, %v737
    %v747 = vmax.f32 %v739, 0.0
    %v748 = vmax.f32 %v740, 0.0
    %v749 = vmax.f32 %v741, 0.0
    %v750 = vmax.f32 %v742, 0.0
    %v751 = vmax.f32 %v743, 0.0
    %v752 = vmax.f32 %v744, 0.0
    %v753 = vmax.f32 %v745, 0.0
    %v754 = vmax.f32 %v746, 0.0
    %v755 = vld [vmem:[%s4] sm:$0xff]
    %v756 = vld [vmem:[%s4 + $0x8] sm:$0xff]
    %v757 = vld [vmem:[%s4 + $0x10] sm:$0xff]
    %v758 = vld [vmem:[%s5] sm:$0x1]
    %v760 = vlaneseq
    %v761 = vshrl.u32 %v760, 7
    %v762 = vsub.s32 0, %v761
    %v763 = vrot.slane %v758, %v762
    %v773 = vrot.slane %v748, 7
    %vm774 = vcmask 1041409
    %v775 = vsel %vm774, %v773, %v747
    %v776 = vrot.slane %v749, 6
    %vm777 = vcmask 1042434
    %v778 = vsel %vm777, %v776, %v775
    %v779 = vrot.slane %v750, 5
    %vm780 = vcmask 1043459
    %v781 = vsel %vm780, %v779, %v778
    %v782 = vrot.slane %v751, 4
    %vm783 = vcmask 1044484
    %v784 = vsel %vm783, %v782, %v781
    %v785 = vrot.slane %v752, 3
    %vm786 = vcmask 1045509
    %v787 = vsel %vm786, %v785, %v784
    %v788 = vrot.slane %v753, 2
    %vm789 = vcmask 1046534
    %v790 = vsel %vm789, %v788, %v787
    %v791 = vrot.slane %v754, 1
    %vm792 = vcmask 1047559
    %v793 = vsel %vm792, %v791, %v790
    %v794 = vsel %vm659, %v793, 0
    %796 = vmatprep.subr.mxu0 0.0
    %797 = vmatpush1.msra.mxu0 %v755
    %798 = vmatprep.subr.mxu0 0.0
    %799 = vmatpush1.msra.mxu0 %v756
    %800 = vmatprep.subr.mxu0 0.0
    %801 = vmatpush1.msra.mxu0 %v757
    %802 = vmatprep.subr.mxu0 0.0
    %803 = vmatpush1.msra.mxu0 0.0
    %804 = vmatprep.subr.mxu0 0.0
    %805 = vmatpush1.msra.mxu0 0.0
    %806 = vmatprep.subr.mxu0 0.0
    %807 = vmatpush1.msra.mxu0 0.0
    %808 = vmatprep.subr.mxu0 0.0
    %809 = vmatpush1.msra.mxu0 0.0
    %810 = vmatprep.subr.mxu0 0.0
    %811 = vmatpush1.msra.mxu0 0.0
    %812 = vmatprep.subr.mxu0 0.0
    %813 = vmatpush1.msra.mxu0 0.0
    %814 = vmatprep.subr.mxu0 0.0
    %815 = vmatpush1.msra.mxu0 0.0
    %816 = vmatprep.subr.mxu0 0.0
    %817 = vmatpush1.msra.mxu0 0.0
    %818 = vmatprep.subr.mxu0 0.0
    %819 = vmatpush1.msra.mxu0 0.0
    %820 = vmatprep.subr.mxu0 0.0
    %821 = vmatpush1.msra.mxu0 0.0
    %822 = vmatprep.subr.mxu0 0.0
    %823 = vmatpush1.msra.mxu0 0.0
    %824 = vmatprep.subr.mxu0 0.0
    %825 = vmatpush1.msra.mxu0 0.0
    %826 = vmatprep.subr.mxu0 0.0
    %827 = vmatpush1.msra.mxu0 0.0
    %828 = vmatprep.subr.mxu0 0.0
    %829 = vmatpush1.msra.mxu0 0.0
    %830 = vmatprep.subr.mxu0 0.0
    %831 = vmatpush1.msra.mxu0 0.0
    %832 = vmatprep.subr.mxu0 0.0
    %833 = vmatpush1.msra.mxu0 0.0
    %834 = vmatprep.subr.mxu0 0.0
    %835 = vmatpush1.msra.mxu0 0.0
    %836 = vmatprep.subr.mxu0 0.0
    %837 = vmatpush1.msra.mxu0 0.0
    %838 = vmatprep.subr.mxu0 0.0
    %839 = vmatpush1.msra.mxu0 0.0
    %840 = vmatprep.subr.mxu0 0.0
    %841 = vmatpush1.msra.mxu0 0.0
    %842 = vmatprep.subr.mxu0 0.0
    %843 = vmatpush1.msra.mxu0 0.0
    %844 = vmatprep.subr.mxu0 0.0
    %845 = vmatpush1.msra.mxu0 0.0
    %846 = vmatprep.subr.mxu0 0.0
    %847 = vmatpush1.msra.mxu0 0.0
    %848 = vmatprep.subr.mxu0 0.0
    %849 = vmatpush1.msra.mxu0 0.0
    %850 = vmatprep.subr.mxu0 0.0
    %851 = vmatpush1.msra.mxu0 0.0
    %852 = vmatprep.subr.mxu0 0.0
    %853 = vmatpush1.msra.mxu0 0.0
    %854 = vmatprep.subr.mxu0 0.0
    %855 = vmatpush1.msra.mxu0 0.0
    %856 = vmatprep.subr.mxu0 0.0
    %857 = vmatpush1.msra.mxu0 0.0
    %858 = vmatprep.subr.mxu0 0.0
    %859 = vmatpush1.msra.mxu0 0.0
    %860 = vmatprep.mubr.f32.mxu0 0.0
    %861 = vmatmul.mubr.f32.gmra.mrb[0].mxu0 %v794
    %v862 = vpop.f32.mrb[0].mxu0
    %v863 = vadd.f32 %v763, %v862
    %v864 = vpop.f32.mrb[0].mxu0
    %865 = vdwg.mxu0
    %866 = vst [vmem:[#allocation2] sm:$0xff] %v863
    // Predicated region
    $region26: #{tpu_custom_call.1} parent=1 // pred_check
      _
    $region27: #{tpu_custom_call.1} parent=1 // pred_check_branch
      %868 = sbr.rel (0) target = $region29
    $region28: #{tpu_custom_call.1} parent=1 // pred_region
      %s870 = ssub.s32 128, 128
      %871 = vsyncadd [#allocation3], %s870
      %s873 = sshll.u32 [#allocation2], 4
      %s874 = int_to_ptr.vmem [resolvable:$true] %s873
      %876 = dma.vmem_to_hbm [thread:$0]  %s874, 128, %s6, [#allocation3]
    $region29: #{tpu_custom_call.1} parent=1 // pred_fallthru
      _
    // Predicated region
    $region30: #{tpu_custom_call.1} parent=1 // pred_check
      _
    $region31: #{tpu_custom_call.1} parent=1 // pred_check_branch
      %878 = sbr.rel (0) target = $region33
    $region32: #{tpu_custom_call.1} parent=1 // pred_region
      %879 = dma.done [#allocation3], 128
    $region33: #{tpu_custom_call.1} parent=1 // pred_fallthru
      _
    %880 = vsyncpa [#allocation3], 1

</llo_original>
